<compile_context>
chip_gen: v7x
topology: tpu7x:2x2x1
jax: 0.10.0
libtpu: 0.0.40
codegen_flags: <defaults>
</compile_context>

<pallas_src>
import jax
import jax.numpy as jnp
from jax.experimental import pallas as pl
from jax.experimental.pallas import tpu as pltpu


def value_net_kernel(x_ref, w1_ref, b1_ref, w2_ref, b2_ref, w3_ref, b3_ref,
                     out_ref):
    # In-kernel bf16 cast of the activation tile (VPU), feeding the MXU.
    x = x_ref[...].astype(jnp.bfloat16)

    # fc1: (TB, D)bf16 @ (D, H)bf16 -> f32 accumulator on the MXU.
    h1 = jnp.dot(x, w1_ref[...], preferred_element_type=jnp.float32)
    h1 = jnp.maximum(h1 + b1_ref[...], 0.0)          # bias + ReLU in f32 (VPU)

    # fc2: (TB, H)bf16 @ (H, H)bf16 -> f32 accumulator on the MXU.
    h2 = jnp.dot(h1.astype(jnp.bfloat16), w2_ref[...],
                 preferred_element_type=jnp.float32)
    h2 = jnp.maximum(h2 + b2_ref[...], 0.0)

    # fc3: output width 1 -> VPU multiply + lane reduction (f32); frees the
    # MXU for the next tile's fc1/fc2.
    v = jnp.sum(h2 * w3_ref[...], axis=-1, keepdims=True) + b3_ref[...]
    out_ref[...] = v.astype(out_ref.dtype)


def value_net_forward(x, params, *, tb=256, core_parallel=False):
    """Forward pass.  x: [B, critic_input_dim] float32 -> [B, 1] float32.

    tb: batch tile.  256 fills the v6e/v7x MXU M-dim and amortizes per-step
        overhead; 128 is fine on v5e / tiny batches.  Partial last tiles are
        handled by Pallas (no padding needed).
    core_parallel: set True on v7x (2 TensorCores) so the batch tiles are
        actually split across cores; keep tb such that num_tiles >= 2 there.
    """
    B, D = x.shape
    H = params["w1"].shape[1]
    num_tiles = pl.cdiv(B, tb)

    # Weights are expected pre-cast to bf16 at init; these asypes are
    # trace-time no-ops when that's the case.
    w1 = params["w1"] if params["w1"].dtype == jnp.bfloat16 \
        else params["w1"].astype(jnp.bfloat16)
    w2 = params["w2"] if params["w2"].dtype == jnp.bfloat16 \
        else params["w2"].astype(jnp.bfloat16)
    b1 = params["b1"]                      # (1, H) f32
    b2 = params["b2"]                      # (1, H) f32
    w3 = params["w3"]                      # (1, H) f32 row for the VPU reduce
    b3 = params["b3"]                      # (1, 1) f32

    # Whole-array resident operand: same block every grid step -> DMA'd once.
    def resident(arr):
        return pl.BlockSpec(arr.shape, lambda i: (0, 0))

    flops = 2 * num_tiles * tb * (D * H + H * H + H)
    bytes_accessed = (x.size * 4 + w1.size * 2 + w2.size * 2
                      + (b1.size + b2.size + w3.size + b3.size) * 4
                      + B * 4)

    semantics = (pltpu.CORE_PARALLEL,) if core_parallel else ("parallel",)

    out = pl.pallas_call(
        value_net_kernel,
        out_shape=jax.ShapeDtypeStruct((B, 1), jnp.float32),
        grid_spec=pltpu.PrefetchScalarGridSpec(
            num_scalar_prefetch=0,
            grid=(num_tiles,),
            in_specs=[
                pl.BlockSpec((tb, D), lambda i: (i, 0)),   # x: batch-tiled f32
                resident(w1), resident(b1),                # weights resident
                resident(w2), resident(b2),
                resident(w3), resident(b3),
            ],
            out_specs=pl.BlockSpec((tb, 1), lambda i: (i, 0)),
        ),
        compiler_params=pltpu.CompilerParams(dimension_semantics=semantics),
        cost_estimate=pl.CostEstimate(flops=flops, transcendentals=0,
                                      bytes_accessed=bytes_accessed),
    )(x, w1, b1, w2, b2, w3, b3)

    return out


def init_params(key, critic_input_dim, hidden_dim):
    """Deterministic init mimicking PyTorch's default Linear init
    (uniform(-1/sqrt(fan_in), 1/sqrt(fan_in))).

    MXU weights (w1, w2) are stored [in, out] and pre-cast to bf16 once here
    (per perf review: avoid per-forward casts).  Biases / w3 stay f32.
    """
    ks = jax.random.split(key, 6)

    def linear(kw, kb, fan_in, fan_out):
        bound = 1.0 / jnp.sqrt(fan_in)
        w = jax.random.uniform(kw, (fan_in, fan_out), jnp.float32, -bound, bound)
        b = jax.random.uniform(kb, (1, fan_out), jnp.float32, -bound, bound)
        return w, b

    w1, b1 = linear(ks[0], ks[1], critic_input_dim, hidden_dim)
    w2, b2 = linear(ks[2], ks[3], hidden_dim, hidden_dim)
    w3, b3 = linear(ks[4], ks[5], hidden_dim, 1)
    return {
        "w1": w1.astype(jnp.bfloat16), "b1": b1,
        "w2": w2.astype(jnp.bfloat16), "b2": b2,
        "w3": w3.reshape(1, hidden_dim),      # (1, H) f32 row
        "b3": b3.reshape(1, 1),               # (1, 1) f32
    }


if __name__ == "__main__":
    critic_input_dim = 32
    hidden_dim = 128   # module default
    batch = 200        # not a multiple of the tile: exercises partial blocks

    key = jax.random.PRNGKey(0)
    k_params, k_x = jax.random.split(key)

    params = init_params(k_params, critic_input_dim, hidden_dim)
    x = jax.random.normal(k_x, (batch, critic_input_dim), jnp.float32)

    # Default tile (single partial tile) and a smaller tile (2 tiles, last
    # partial) -- both exercise the unpadded partial-block path.
    out = jax.block_until_ready(value_net_forward(x, params))
    out2 = jax.block_until_ready(value_net_forward(x, params, tb=128))
    assert out.shape == (batch, 1)
    assert out2.shape == (batch, 1)

    # Reference 1: same bf16-operand / f32-accumulate math in plain JAX.
    xb = x.astype(jnp.bfloat16)
    h1 = jnp.maximum(
        jnp.dot(xb, params["w1"], preferred_element_type=jnp.float32)
        + params["b1"], 0.0)
    h2 = jnp.maximum(
        jnp.dot(h1.astype(jnp.bfloat16), params["w2"],
                preferred_element_type=jnp.float32) + params["b2"], 0.0)
    ref_bf16 = h2 @ params["w3"].T + params["b3"]
    assert jnp.allclose(out, ref_bf16, atol=2e-3, rtol=2e-3)
    assert jnp.allclose(out2, ref_bf16, atol=2e-3, rtol=2e-3)

    # Reference 2: full-f32 PyTorch-equivalent math (loose tolerance to cover
    # the bf16 matmul operands).
    w1f = params["w1"].astype(jnp.float32)
    w2f = params["w2"].astype(jnp.float32)
    h1f = jnp.maximum(x @ w1f + params["b1"], 0.0)
    h2f = jnp.maximum(h1f @ w2f + params["b2"], 0.0)
    ref_f32 = h2f @ params["w3"].T + params["b3"]
    assert jnp.allclose(out, ref_f32, atol=5e-2, rtol=5e-2)

    print("KERNEL_OK")
</pallas_src>

<mosaic_0001>
module attributes {stable_mosaic.version = 11 : i64} {
  func.func @value_net_kernel(%arg0: i32, %arg1: memref<256x32xf32, #tpu.memory_space<vmem>>, %arg2: memref<32x128xbf16, #tpu.memory_space<vmem>>, %arg3: memref<1x128xf32, #tpu.memory_space<vmem>>, %arg4: memref<128x128xbf16, #tpu.memory_space<vmem>>, %arg5: memref<1x128xf32, #tpu.memory_space<vmem>>, %arg6: memref<1x128xf32, #tpu.memory_space<vmem>>, %arg7: memref<1x1xf32, #tpu.memory_space<vmem>>, %arg8: memref<256x1xf32, #tpu.memory_space<vmem>>) attributes {dimension_semantics = [#tpu.dimension_semantics<parallel>], iteration_bounds = array<i64: 1>, scalar_prefetch = 0 : i64, scratch_operands = 0 : i64, tpu.core_type = #tpu.core_type<tc>, window_params = [{transform_indices = @transform_0, window_bounds = array<i64: 256, 32>}, {pipeline_mode = #tpu.pipeline_mode<synchronous>, transform_indices = @transform_1, window_bounds = array<i64: 32, 128>}, {pipeline_mode = #tpu.pipeline_mode<synchronous>, transform_indices = @transform_2, window_bounds = array<i64: 1, 128>}, {pipeline_mode = #tpu.pipeline_mode<synchronous>, transform_indices = @transform_3, window_bounds = array<i64: 128, 128>}, {pipeline_mode = #tpu.pipeline_mode<synchronous>, transform_indices = @transform_4, window_bounds = array<i64: 1, 128>}, {pipeline_mode = #tpu.pipeline_mode<synchronous>, transform_indices = @transform_5, window_bounds = array<i64: 1, 128>}, {pipeline_mode = #tpu.pipeline_mode<synchronous>, transform_indices = @transform_6, window_bounds = array<i64: 1, 1>}, {transform_indices = @transform_7, window_bounds = array<i64: 256, 1>}]} {
    %c0 = arith.constant 0 : index
    %c0_0 = arith.constant 0 : index
    %0 = vector.load %arg1[%c0, %c0_0] : memref<256x32xf32, #tpu.memory_space<vmem>>, vector<256x32xf32>
    %1 = arith.truncf %0 : vector<256x32xf32> to vector<256x32xbf16>
    %c0_1 = arith.constant 0 : index
    %c0_2 = arith.constant 0 : index
    %2 = vector.load %arg2[%c0_1, %c0_2] : memref<32x128xbf16, #tpu.memory_space<vmem>>, vector<32x128xbf16>
    %cst = arith.constant dense<0.000000e+00> : vector<256x128xf32>
    %3 = tpu.matmul %1, %2, %cst {dimension_numbers = #tpu.dot_dimension_numbers<[1], [0], [0], [1], [0, 0, 1, 1], [], []>} : vector<256x32xbf16>, vector<32x128xbf16>, vector<256x128xf32> -> vector<256x128xf32>
    %c0_3 = arith.constant 0 : index
    %c0_4 = arith.constant 0 : index
    %4 = vector.load %arg3[%c0_3, %c0_4] : memref<1x128xf32, #tpu.memory_space<vmem>>, vector<1x128xf32>
    %5 = vector.broadcast %4 : vector<1x128xf32> to vector<256x128xf32>
    %6 = arith.addf %3, %5 : vector<256x128xf32>
    %cst_5 = arith.constant 0.000000e+00 : f32
    %7 = vector.broadcast %cst_5 : f32 to vector<256x128xf32>
    %8 = arith.maximumf %6, %7 : vector<256x128xf32>
    %9 = arith.truncf %8 : vector<256x128xf32> to vector<256x128xbf16>
    %c0_6 = arith.constant 0 : index
    %c0_7 = arith.constant 0 : index
    %10 = vector.load %arg4[%c0_6, %c0_7] : memref<128x128xbf16, #tpu.memory_space<vmem>>, vector<128x128xbf16>
    %cst_8 = arith.constant dense<0.000000e+00> : vector<256x128xf32>
    %11 = tpu.matmul %9, %10, %cst_8 {dimension_numbers = #tpu.dot_dimension_numbers<[1], [0], [0], [1], [0, 0, 1, 1], [], []>} : vector<256x128xbf16>, vector<128x128xbf16>, vector<256x128xf32> -> vector<256x128xf32>
    %c0_9 = arith.constant 0 : index
    %c0_10 = arith.constant 0 : index
    %12 = vector.load %arg5[%c0_9, %c0_10] : memref<1x128xf32, #tpu.memory_space<vmem>>, vector<1x128xf32>
    %13 = vector.broadcast %12 : vector<1x128xf32> to vector<256x128xf32>
    %14 = arith.addf %11, %13 : vector<256x128xf32>
    %cst_11 = arith.constant 0.000000e+00 : f32
    %15 = vector.broadcast %cst_11 : f32 to vector<256x128xf32>
    %16 = arith.maximumf %14, %15 : vector<256x128xf32>
    %c0_12 = arith.constant 0 : index
    %c0_13 = arith.constant 0 : index
    %17 = vector.load %arg6[%c0_12, %c0_13] : memref<1x128xf32, #tpu.memory_space<vmem>>, vector<1x128xf32>
    %18 = vector.broadcast %17 : vector<1x128xf32> to vector<256x128xf32>
    %19 = arith.mulf %16, %18 : vector<256x128xf32>
    %cst_14 = arith.constant dense<0.000000e+00> : vector<256xf32>
    %20 = vector.multi_reduction <add>, %19, %cst_14 [1] : vector<256x128xf32> to vector<256xf32>
    %21 = vector.shape_cast %20 : vector<256xf32> to vector<256x1xf32>
    %c0_15 = arith.constant 0 : index
    %c0_16 = arith.constant 0 : index
    %22 = vector.load %arg7[%c0_15, %c0_16] : memref<1x1xf32, #tpu.memory_space<vmem>>, vector<1x1xf32>
    %23 = vector.broadcast %22 : vector<1x1xf32> to vector<256x1xf32>
    %24 = arith.addf %21, %23 : vector<256x1xf32>
    %c0_17 = arith.constant 0 : index
    %c0_18 = arith.constant 0 : index
    %25 = vector.load %arg8[%c0_17, %c0_18] : memref<256x1xf32, #tpu.memory_space<vmem>>, vector<256x1xf32>
    tpu.vector_store %arg8[%c0_17, %c0_18], %24 {strides = array<i32>} : memref<256x1xf32, #tpu.memory_space<vmem>>, vector<256x1xf32>,
    return
  }
  func.func @transform_0(%arg0: i32) -> (i32, i32) {
    %c0_i32 = arith.constant 0 : i32
    %c0_i32_0 = arith.constant 0 : i32
    return %arg0, %c0_i32 : i32, i32
  }
  func.func @transform_1(%arg0: i32) -> (i32, i32) {
    %c0_i32 = arith.constant 0 : i32
    %c0_i32_0 = arith.constant 0 : i32
    %c0_i32_1 = arith.constant 0 : i32
    return %c0_i32, %c0_i32_0 : i32, i32
  }
  func.func @transform_2(%arg0: i32) -> (i32, i32) {
    %c0_i32 = arith.constant 0 : i32
    %c0_i32_0 = arith.constant 0 : i32
    %c0_i32_1 = arith.constant 0 : i32
    return %c0_i32, %c0_i32_0 : i32, i32
  }
  func.func @transform_3(%arg0: i32) -> (i32, i32) {
    %c0_i32 = arith.constant 0 : i32
    %c0_i32_0 = arith.constant 0 : i32
    %c0_i32_1 = arith.constant 0 : i32
    return %c0_i32, %c0_i32_0 : i32, i32
  }
  func.func @transform_4(%arg0: i32) -> (i32, i32) {
    %c0_i32 = arith.constant 0 : i32
    %c0_i32_0 = arith.constant 0 : i32
    %c0_i32_1 = arith.constant 0 : i32
    return %c0_i32, %c0_i32_0 : i32, i32
  }
  func.func @transform_5(%arg0: i32) -> (i32, i32) {
    %c0_i32 = arith.constant 0 : i32
    %c0_i32_0 = arith.constant 0 : i32
    %c0_i32_1 = arith.constant 0 : i32
    return %c0_i32, %c0_i32_0 : i32, i32
  }
  func.func @transform_6(%arg0: i32) -> (i32, i32) {
    %c0_i32 = arith.constant 0 : i32
    %c0_i32_0 = arith.constant 0 : i32
    %c0_i32_1 = arith.constant 0 : i32
    return %c0_i32, %c0_i32_0 : i32, i32
  }
  func.func @transform_7(%arg0: i32) -> (i32, i32) {
    %c0_i32 = arith.constant 0 : i32
    %c0_i32_0 = arith.constant 0 : i32
    return %arg0, %c0_i32 : i32, i32
  }
}

</mosaic_0001>

<llo_original>
// kernel: tpu_custom_call.1
$region0: #{tpu_custom_call.1}
  #allocation0 [shape = 'u32[]', space=smem, size = 0x4, offset = 0x4, fixed_abs, tag = 'smem constant byte address 0x4 - core index']
  #allocation1 [shape = 'u32[144,128]{1,0:T(1,128)}', space=vmem, size = 0x12000, scoped, tag = 'internal scratch']
  #allocation2 [shape = 'f32[1,1]{1,0:T(1,128)S(1)}', space=vmem, size = 0x200, scoped, tag = 'scoped memory for tpu_custom_call.1']
  %s0 = inlined_call_operand.vmem [shape: f32[200,32], index: 0, kind: input, shape index: {}]
  %s1 = inlined_call_operand.vmem [shape: bf16[32,128], index: 1, kind: input, shape index: {}]
  %s2 = inlined_call_operand.vmem [shape: f32[1,128], index: 2, kind: input, shape index: {}]
  %s3 = inlined_call_operand.vmem [shape: bf16[128,128], index: 3, kind: input, shape index: {}]
  %s4 = inlined_call_operand.vmem [shape: f32[1,128], index: 4, kind: input, shape index: {}]
  %s5 = inlined_call_operand.vmem [shape: f32[1,128], index: 5, kind: input, shape index: {}]
  %s6 = inlined_call_operand.<no memory space> [shape: f32[1,1], index: 6, kind: input, shape index: {}]
  %s7 = inlined_call_operand.vmem [shape: f32[200,1], index: 7, kind: output, shape index: {}]
  %s8 = sld [smem:[#allocation0]]
  $region72: #{tpu_custom_call.1} parent=0
    _
  %s10 = ssub.s32 1, %s8
  %s11 = scalar_select 0, %s10, %s8
  %v12 = vstv %s6
  %13 = vst [vmem:[#allocation2] sm:$0x1] %v12
  $region1: #{tpu_custom_call.1} parent=0
    #allocation3 [shape = 'u8[131072]{0}', space=vmem, size = 0x20000, scoped, tag = 'output window, operand 0, single buffered']
    // Predicated region
    $region2: #{tpu_custom_call.1} parent=1 // pred_check
      _
    $region3: #{tpu_custom_call.1} parent=1 // pred_check_branch
      %15 = sbr.rel (0) target = $region5
    $region4: #{tpu_custom_call.1} parent=1 // pred_region
      _
    $region5: #{tpu_custom_call.1} parent=1 // pred_fallthru
      _
    // Predicated region
    $region6: #{tpu_custom_call.1} parent=1 // pred_check
      _
    $region7: #{tpu_custom_call.1} parent=1 // pred_check_branch
      %17 = sbr.rel (0) target = $region9
    $region8: #{tpu_custom_call.1} parent=1 // pred_region
      _
    $region9: #{tpu_custom_call.1} parent=1 // pred_fallthru
      _
    // Predicated region
    $region10: #{tpu_custom_call.1} parent=1 // pred_check
      _
    $region11: #{tpu_custom_call.1} parent=1 // pred_check_branch
      %19 = sbr.rel (0) target = $region13
    $region12: #{tpu_custom_call.1} parent=1 // pred_region
      _
    $region13: #{tpu_custom_call.1} parent=1 // pred_fallthru
      _
    // Predicated region
    $region14: #{tpu_custom_call.1} parent=1 // pred_check
      _
    $region15: #{tpu_custom_call.1} parent=1 // pred_check_branch
      %21 = sbr.rel (0) target = $region17
    $region16: #{tpu_custom_call.1} parent=1 // pred_region
      _
    $region17: #{tpu_custom_call.1} parent=1 // pred_fallthru
      _
    // Predicated region
    $region18: #{tpu_custom_call.1} parent=1 // pred_check
      _
    $region19: #{tpu_custom_call.1} parent=1 // pred_check_branch
      %23 = sbr.rel (0) target = $region21
    $region20: #{tpu_custom_call.1} parent=1 // pred_region
      _
    $region21: #{tpu_custom_call.1} parent=1 // pred_fallthru
      _
    // Predicated region
    $region22: #{tpu_custom_call.1} parent=1 // pred_check
      _
    $region23: #{tpu_custom_call.1} parent=1 // pred_check_branch
      %25 = sbr.rel (0) target = $region25
    $region24: #{tpu_custom_call.1} parent=1 // pred_region
      _
    $region25: #{tpu_custom_call.1} parent=1 // pred_fallthru
      _
    // Predicated region
    $region26: #{tpu_custom_call.1} parent=1 // pred_check
      _
    $region27: #{tpu_custom_call.1} parent=1 // pred_check_branch
      %27 = sbr.rel (0) target = $region29
    $region28: #{tpu_custom_call.1} parent=1 // pred_region
      _
    $region29: #{tpu_custom_call.1} parent=1 // pred_fallthru
      _
    %v29 = vld [vmem:[%s0] sm:$0xff]
    %v30 = vld [vmem:[%s0 + $0x8] sm:$0xff]
    %v31 = vld [vmem:[%s0 + $0x10] sm:$0xff]
    %v32 = vld [vmem:[%s0 + $0x18] sm:$0xff]
    %v33 = vld [vmem:[%s0 + $0x20] sm:$0xff]
    %v34 = vld [vmem:[%s0 + $0x28] sm:$0xff]
    %v35 = vld [vmem:[%s0 + $0x30] sm:$0xff]
    %v36 = vld [vmem:[%s0 + $0x38] sm:$0xff]
    %v37 = vld [vmem:[%s0 + $0x40] sm:$0xff]
    %v38 = vld [vmem:[%s0 + $0x48] sm:$0xff]
    %v39 = vld [vmem:[%s0 + $0x50] sm:$0xff]
    %v40 = vld [vmem:[%s0 + $0x58] sm:$0xff]
    %v41 = vld [vmem:[%s0 + $0x60] sm:$0xff]
    %v42 = vld [vmem:[%s0 + $0x68] sm:$0xff]
    %v43 = vld [vmem:[%s0 + $0x70] sm:$0xff]
    %v44 = vld [vmem:[%s0 + $0x78] sm:$0xff]
    %v45 = vld [vmem:[%s0 + $0x80] sm:$0xff]
    %v46 = vld [vmem:[%s0 + $0x88] sm:$0xff]
    %v47 = vld [vmem:[%s0 + $0x90] sm:$0xff]
    %v48 = vld [vmem:[%s0 + $0x98] sm:$0xff]
    %v49 = vld [vmem:[%s0 + $0xa0] sm:$0xff]
    %v50 = vld [vmem:[%s0 + $0xa8] sm:$0xff]
    %v51 = vld [vmem:[%s0 + $0xb0] sm:$0xff]
    %v52 = vld [vmem:[%s0 + $0xb8] sm:$0xff]
    %v53 = vld [vmem:[%s0 + $0xc0] sm:$0xff]
    %v54 = vld [vmem:[%s0 + $0xc8] sm:$0xff]
    %v55 = vld [vmem:[%s0 + $0xd0] sm:$0xff]
    %v56 = vld [vmem:[%s0 + $0xd8] sm:$0xff]
    %v57 = vld [vmem:[%s0 + $0xe0] sm:$0xff]
    %v58 = vld [vmem:[%s0 + $0xe8] sm:$0xff]
    %v59 = vld [vmem:[%s0 + $0xf0] sm:$0xff]
    %v60 = vld [vmem:[%s0 + $0xf8] sm:$0xff]
    %v61 = vpack.c.bf16 %v30, %v29
    %v62 = vpack.c.bf16 %v32, %v31
    %v63 = vpack.c.bf16 %v34, %v33
    %v64 = vpack.c.bf16 %v36, %v35
    %v65 = vpack.c.bf16 %v38, %v37
    %v66 = vpack.c.bf16 %v40, %v39
    %v67 = vpack.c.bf16 %v42, %v41
    %v68 = vpack.c.bf16 %v44, %v43
    %v69 = vpack.c.bf16 %v46, %v45
    %v70 = vpack.c.bf16 %v48, %v47
    %v71 = vpack.c.bf16 %v50, %v49
    %v72 = vpack.c.bf16 %v52, %v51
    %v73 = vpack.c.bf16 %v54, %v53
    %v74 = vpack.c.bf16 %v56, %v55
    %v75 = vpack.c.bf16 %v58, %v57
    %v76 = vpack.c.bf16 %v60, %v59
    %v77 = vld [vmem:[%s1] sm:$0xf]
    %v78 = vld [vmem:[%s1 + $0x4] sm:$0xf]
    %v79 = vld [vmem:[%s1 + $0x8] sm:$0xf]
    %v80 = vld [vmem:[%s1 + $0xc] sm:$0xf]
    %v81 = vld [vmem:[%s2] sm:$0x1]
    %v83 = vlaneseq
    %v84 = vshrl.u32 %v83, 7
    %v85 = vsub.s32 0, %v84
    %v86 = vrot.slane %v81, %v85
    %v92 = vunpack.c.l.b16 %v77
    %v93 = vunpack.c.l.b16 %v78
    %v94 = vunpack.c.l.b16 %v79
    %v95 = vunpack.c.l.b16 %v80
    %v96 = vpack.c.b16 %v93, %v92
    %v97 = vpack.c.b16 %v95, %v94
    %vm100 = vcmask 261120
    %v102 = vsel %vm100, %v61, 0
    %v105 = vsel %vm100, %v62, 0
    %v108 = vsel %vm100, %v63, 0
    %v111 = vsel %vm100, %v64, 0
    %v114 = vsel %vm100, %v65, 0
    %v117 = vsel %vm100, %v66, 0
    %v120 = vsel %vm100, %v67, 0
    %v123 = vsel %vm100, %v68, 0
    %v126 = vsel %vm100, %v69, 0
    %v129 = vsel %vm100, %v70, 0
    %v132 = vsel %vm100, %v71, 0
    %v135 = vsel %vm100, %v72, 0
    %v138 = vsel %vm100, %v73, 0
    %v141 = vsel %vm100, %v74, 0
    %v144 = vsel %vm100, %v75, 0
    %v147 = vsel %vm100, %v76, 0
    %149 = vmatprep.subr.bf16.mxu0 0
    %150 = vmatpush1.bf16.msra.mxu0 %v96
    %151 = vmatprep.subr.bf16.mxu0 0
    %152 = vmatpush1.bf16.msra.mxu0 %v97
    %153 = vmatprep.subr.bf16.mxu0 0
    %154 = vmatpush1.bf16.msra.mxu0 0
    %155 = vmatprep.subr.bf16.mxu0 0
    %156 = vmatpush1.bf16.msra.mxu0 0
    %157 = vmatprep.subr.bf16.mxu0 0
    %158 = vmatpush1.bf16.msra.mxu0 0
    %159 = vmatprep.subr.bf16.mxu0 0
    %160 = vmatpush1.bf16.msra.mxu0 0
    %161 = vmatprep.subr.bf16.mxu0 0
    %162 = vmatpush1.bf16.msra.mxu0 0
    %163 = vmatprep.subr.bf16.mxu0 0
    %164 = vmatpush1.bf16.msra.mxu0 0
    %165 = vmatprep.subr.bf16.mxu0 0
    %166 = vmatpush1.bf16.msra.mxu0 0
    %167 = vmatprep.subr.bf16.mxu0 0
    %168 = vmatpush1.bf16.msra.mxu0 0
    %169 = vmatprep.subr.bf16.mxu0 0
    %170 = vmatpush1.bf16.msra.mxu0 0
    %171 = vmatprep.subr.bf16.mxu0 0
    %172 = vmatpush1.bf16.msra.mxu0 0
    %173 = vmatprep.subr.bf16.mxu0 0
    %174 = vmatpush1.bf16.msra.mxu0 0
    %175 = vmatprep.subr.bf16.mxu0 0
    %176 = vmatpush1.bf16.msra.mxu0 0
    %177 = vmatprep.subr.bf16.mxu0 0
    %178 = vmatpush1.bf16.msra.mxu0 0
    %179 = vmatprep.subr.bf16.mxu0 0
    %180 = vmatpush1.bf16.msra.mxu0 0
    %181 = vmatprep.mubr.bf16.mxu0 0
    %182 = vmatmul.mubr.bf16.gmra.mrb[0].mxu0 %v102
    %v183 = vpop.f32.mrb[0].mxu0
    %v184 = vadd.f32 %v86, %v183
    %v185 = vpop.f32.mrb[0].mxu0
    %v186 = vpop.f32.mrb[0].mxu0
    %v187 = vadd.f32 %v86, %v186
    %v188 = vpop.f32.mrb[0].mxu0
    %189 = vmatprep.mubr.bf16.mxu0 0
    %190 = vmatmul.mubr.bf16.gmra.mrb[0].mxu0 %v105
    %v191 = vpop.f32.mrb[0].mxu0
    %v192 = vadd.f32 %v86, %v191
    %v193 = vpop.f32.mrb[0].mxu0
    %v194 = vpop.f32.mrb[0].mxu0
    %v195 = vadd.f32 %v86, %v194
    %v196 = vpop.f32.mrb[0].mxu0
    %197 = vmatprep.mubr.bf16.mxu0 0
    %198 = vmatmul.mubr.bf16.gmra.mrb[0].mxu0 %v108
    %v199 = vpop.f32.mrb[0].mxu0
    %v200 = vadd.f32 %v86, %v199
    %v201 = vpop.f32.mrb[0].mxu0
    %v202 = vpop.f32.mrb[0].mxu0
    %v203 = vadd.f32 %v86, %v202
    %v204 = vpop.f32.mrb[0].mxu0
    %205 = vmatprep.mubr.bf16.mxu0 0
    %206 = vmatmul.mubr.bf16.gmra.mrb[0].mxu0 %v111
    %v207 = vpop.f32.mrb[0].mxu0
    %v208 = vadd.f32 %v86, %v207
    %v209 = vpop.f32.mrb[0].mxu0
    %v210 = vpop.f32.mrb[0].mxu0
    %v211 = vadd.f32 %v86, %v210
    %v212 = vpop.f32.mrb[0].mxu0
    %213 = vmatprep.mubr.bf16.mxu0 0
    %214 = vmatmul.mubr.bf16.gmra.mrb[0].mxu0 %v114
    %v215 = vpop.f32.mrb[0].mxu0
    %v216 = vadd.f32 %v86, %v215
    %v217 = vpop.f32.mrb[0].mxu0
    %v218 = vpop.f32.mrb[0].mxu0
    %v219 = vadd.f32 %v86, %v218
    %v220 = vpop.f32.mrb[0].mxu0
    %221 = vmatprep.mubr.bf16.mxu0 0
    %222 = vmatmul.mubr.bf16.gmra.mrb[0].mxu0 %v117
    %v223 = vpop.f32.mrb[0].mxu0
    %v224 = vadd.f32 %v86, %v223
    %v225 = vpop.f32.mrb[0].mxu0
    %v226 = vpop.f32.mrb[0].mxu0
    %v227 = vadd.f32 %v86, %v226
    %v228 = vpop.f32.mrb[0].mxu0
    %229 = vmatprep.mubr.bf16.mxu0 0
    %230 = vmatmul.mubr.bf16.gmra.mrb[0].mxu0 %v120
    %v231 = vpop.f32.mrb[0].mxu0
    %v232 = vadd.f32 %v86, %v231
    %v233 = vpop.f32.mrb[0].mxu0
    %v234 = vpop.f32.mrb[0].mxu0
    %v235 = vadd.f32 %v86, %v234
    %v236 = vpop.f32.mrb[0].mxu0
    %237 = vmatprep.mubr.bf16.mxu0 0
    %238 = vmatmul.mubr.bf16.gmra.mrb[0].mxu0 %v123
    %v239 = vpop.f32.mrb[0].mxu0
    %v240 = vadd.f32 %v86, %v239
    %v241 = vpop.f32.mrb[0].mxu0
    %v242 = vpop.f32.mrb[0].mxu0
    %v243 = vadd.f32 %v86, %v242
    %v244 = vpop.f32.mrb[0].mxu0
    %245 = vmatprep.mubr.bf16.mxu0 0
    %246 = vmatmul.mubr.bf16.gmra.mrb[0].mxu0 %v126
    %v247 = vpop.f32.mrb[0].mxu0
    %v248 = vadd.f32 %v86, %v247
    %v249 = vpop.f32.mrb[0].mxu0
    %v250 = vpop.f32.mrb[0].mxu0
    %v251 = vadd.f32 %v86, %v250
    %v252 = vpop.f32.mrb[0].mxu0
    %253 = vmatprep.mubr.bf16.mxu0 0
    %254 = vmatmul.mubr.bf16.gmra.mrb[0].mxu0 %v129
    %v255 = vpop.f32.mrb[0].mxu0
    %v256 = vadd.f32 %v86, %v255
    %v257 = vpop.f32.mrb[0].mxu0
    %v258 = vpop.f32.mrb[0].mxu0
    %v259 = vadd.f32 %v86, %v258
    %v260 = vpop.f32.mrb[0].mxu0
    %261 = vmatprep.mubr.bf16.mxu0 0
    %262 = vmatmul.mubr.bf16.gmra.mrb[0].mxu0 %v132
    %v263 = vpop.f32.mrb[0].mxu0
    %v264 = vadd.f32 %v86, %v263
    %v265 = vpop.f32.mrb[0].mxu0
    %v266 = vpop.f32.mrb[0].mxu0
    %v267 = vadd.f32 %v86, %v266
    %v268 = vpop.f32.mrb[0].mxu0
    %269 = vmatprep.mubr.bf16.mxu0 0
    %270 = vmatmul.mubr.bf16.gmra.mrb[0].mxu0 %v135
    %v271 = vpop.f32.mrb[0].mxu0
    %v272 = vadd.f32 %v86, %v271
    %v273 = vpop.f32.mrb[0].mxu0
    %v274 = vpop.f32.mrb[0].mxu0
    %v275 = vadd.f32 %v86, %v274
    %v276 = vpop.f32.mrb[0].mxu0
    %277 = vmatprep.mubr.bf16.mxu0 0
    %278 = vmatmul.mubr.bf16.gmra.mrb[0].mxu0 %v138
    %v279 = vpop.f32.mrb[0].mxu0
    %v280 = vadd.f32 %v86, %v279
    %v281 = vpop.f32.mrb[0].mxu0
    %v282 = vpop.f32.mrb[0].mxu0
    %v283 = vadd.f32 %v86, %v282
    %v284 = vpop.f32.mrb[0].mxu0
    %285 = vmatprep.mubr.bf16.mxu0 0
    %286 = vmatmul.mubr.bf16.gmra.mrb[0].mxu0 %v141
    %v287 = vpop.f32.mrb[0].mxu0
    %v288 = vadd.f32 %v86, %v287
    %v289 = vpop.f32.mrb[0].mxu0
    %v290 = vpop.f32.mrb[0].mxu0
    %v291 = vadd.f32 %v86, %v290
    %v292 = vpop.f32.mrb[0].mxu0
    %293 = vmatprep.mubr.bf16.mxu0 0
    %294 = vmatmul.mubr.bf16.gmra.mrb[0].mxu0 %v144
    %v295 = vpop.f32.mrb[0].mxu0
    %v296 = vadd.f32 %v86, %v295
    %v297 = vpop.f32.mrb[0].mxu0
    %v298 = vpop.f32.mrb[0].mxu0
    %v299 = vadd.f32 %v86, %v298
    %v300 = vpop.f32.mrb[0].mxu0
    %301 = vmatprep.mubr.bf16.mxu0 0
    %302 = vmatmul.mubr.bf16.gmra.mrb[0].mxu0 %v147
    %v303 = vpop.f32.mrb[0].mxu0
    %v304 = vadd.f32 %v86, %v303
    %v305 = vpop.f32.mrb[0].mxu0
    %v306 = vpop.f32.mrb[0].mxu0
    %v307 = vadd.f32 %v86, %v306
    %v308 = vpop.f32.mrb[0].mxu0
    %309 = vdwg.mxu0
    %v310 = vmax.f32 %v184, 0.0
    %v311 = vmax.f32 %v187, 0.0
    %v312 = vmax.f32 %v192, 0.0
    %v313 = vmax.f32 %v195, 0.0
    %v314 = vmax.f32 %v200, 0.0
    %v315 = vmax.f32 %v203, 0.0
    %v316 = vmax.f32 %v208, 0.0
    %v317 = vmax.f32 %v211, 0.0
    %v318 = vmax.f32 %v216, 0.0
    %v319 = vmax.f32 %v219, 0.0
    %v320 = vmax.f32 %v224, 0.0
    %v321 = vmax.f32 %v227, 0.0
    %v322 = vmax.f32 %v232, 0.0
    %v323 = vmax.f32 %v235, 0.0
    %v324 = vmax.f32 %v240, 0.0
    %v325 = vmax.f32 %v243, 0.0
    %v326 = vmax.f32 %v248, 0.0
    %v327 = vmax.f32 %v251, 0.0
    %v328 = vmax.f32 %v256, 0.0
    %v329 = vmax.f32 %v259, 0.0
    %v330 = vmax.f32 %v264, 0.0
    %v331 = vmax.f32 %v267, 0.0
    %v332 = vmax.f32 %v272, 0.0
    %v333 = vmax.f32 %v275, 0.0
    %v334 = vmax.f32 %v280, 0.0
    %v335 = vmax.f32 %v283, 0.0
    %v336 = vmax.f32 %v288, 0.0
    %v337 = vmax.f32 %v291, 0.0
    %v338 = vmax.f32 %v296, 0.0
    %v339 = vmax.f32 %v299, 0.0
    %v340 = vmax.f32 %v304, 0.0
    %v341 = vmax.f32 %v307, 0.0
    %v342 = vpack.c.bf16 %v311, %v310
    %v343 = vpack.c.bf16 %v313, %v312
    %v344 = vpack.c.bf16 %v315, %v314
    %v345 = vpack.c.bf16 %v317, %v316
    %v346 = vpack.c.bf16 %v319, %v318
    %v347 = vpack.c.bf16 %v321, %v320
    %v348 = vpack.c.bf16 %v323, %v322
    %v349 = vpack.c.bf16 %v325, %v324
    %v350 = vpack.c.bf16 %v327, %v326
    %v351 = vpack.c.bf16 %v329, %v328
    %v352 = vpack.c.bf16 %v331, %v330
    %v353 = vpack.c.bf16 %v333, %v332
    %v354 = vpack.c.bf16 %v335, %v334
    %v355 = vpack.c.bf16 %v337, %v336
    %v356 = vpack.c.bf16 %v339, %v338
    %v357 = vpack.c.bf16 %v341, %v340
    %v358 = vld [vmem:[%s3] sm:$0xf]
    %v359 = vld [vmem:[%s3 + $0x4] sm:$0xf]
    %v360 = vld [vmem:[%s3 + $0x8] sm:$0xf]
    %v361 = vld [vmem:[%s3 + $0xc] sm:$0xf]
    %v362 = vld [vmem:[%s3 + $0x10] sm:$0xf]
    %v363 = vld [vmem:[%s3 + $0x14] sm:$0xf]
    %v364 = vld [vmem:[%s3 + $0x18] sm:$0xf]
    %v365 = vld [vmem:[%s3 + $0x1c] sm:$0xf]
    %v366 = vld [vmem:[%s3 + $0x20] sm:$0xf]
    %v367 = vld [vmem:[%s3 + $0x24] sm:$0xf]
    %v368 = vld [vmem:[%s3 + $0x28] sm:$0xf]
    %v369 = vld [vmem:[%s3 + $0x2c] sm:$0xf]
    %v370 = vld [vmem:[%s3 + $0x30] sm:$0xf]
    %v371 = vld [vmem:[%s3 + $0x34] sm:$0xf]
    %v372 = vld [vmem:[%s3 + $0x38] sm:$0xf]
    %v373 = vld [vmem:[%s3 + $0x3c] sm:$0xf]
    %v374 = vld [vmem:[%s4] sm:$0x1]
    %v376 = vlaneseq
    %v377 = vshrl.u32 %v376, 7
    %v378 = vsub.s32 0, %v377
    %v379 = vrot.slane %v374, %v378
    %v397 = vunpack.c.l.b16 %v358
    %v398 = vunpack.c.l.b16 %v359
    %v399 = vunpack.c.l.b16 %v360
    %v400 = vunpack.c.l.b16 %v361
    %v401 = vunpack.c.l.b16 %v362
    %v402 = vunpack.c.l.b16 %v363
    %v403 = vunpack.c.l.b16 %v364
    %v404 = vunpack.c.l.b16 %v365
    %v405 = vunpack.c.l.b16 %v366
    %v406 = vunpack.c.l.b16 %v367
    %v407 = vunpack.c.l.b16 %v368
    %v408 = vunpack.c.l.b16 %v369
    %v409 = vunpack.c.l.b16 %v370
    %v410 = vunpack.c.l.b16 %v371
    %v411 = vunpack.c.l.b16 %v372
    %v412 = vunpack.c.l.b16 %v373
    %v413 = vpack.c.b16 %v398, %v397
    %v414 = vpack.c.b16 %v400, %v399
    %v415 = vpack.c.b16 %v402, %v401
    %v416 = vpack.c.b16 %v404, %v403
    %v417 = vpack.c.b16 %v406, %v405
    %v418 = vpack.c.b16 %v408, %v407
    %v419 = vpack.c.b16 %v410, %v409
    %v420 = vpack.c.b16 %v412, %v411
    %429 = vmatprep.subr.bf16.mxu0 0
    %430 = vmatpush1.bf16.msra.mxu0 %v413
    %431 = vmatprep.subr.bf16.mxu0 0
    %432 = vmatpush1.bf16.msra.mxu0 %v414
    %433 = vmatprep.subr.bf16.mxu0 0
    %434 = vmatpush1.bf16.msra.mxu0 %v415
    %435 = vmatprep.subr.bf16.mxu0 0
    %436 = vmatpush1.bf16.msra.mxu0 %v416
    %437 = vmatprep.subr.bf16.mxu0 0
    %438 = vmatpush1.bf16.msra.mxu0 %v417
    %439 = vmatprep.subr.bf16.mxu0 0
    %440 = vmatpush1.bf16.msra.mxu0 %v418
    %441 = vmatprep.subr.bf16.mxu0 0
    %442 = vmatpush1.bf16.msra.mxu0 %v419
    %443 = vmatprep.subr.bf16.mxu0 0
    %444 = vmatpush1.bf16.msra.mxu0 %v420
    %445 = vmatprep.subr.bf16.mxu0 0
    %446 = vmatpush1.bf16.msra.mxu0 0
    %447 = vmatprep.subr.bf16.mxu0 0
    %448 = vmatpush1.bf16.msra.mxu0 0
    %449 = vmatprep.subr.bf16.mxu0 0
    %450 = vmatpush1.bf16.msra.mxu0 0
    %451 = vmatprep.subr.bf16.mxu0 0
    %452 = vmatpush1.bf16.msra.mxu0 0
    %453 = vmatprep.subr.bf16.mxu0 0
    %454 = vmatpush1.bf16.msra.mxu0 0
    %455 = vmatprep.subr.bf16.mxu0 0
    %456 = vmatpush1.bf16.msra.mxu0 0
    %457 = vmatprep.subr.bf16.mxu0 0
    %458 = vmatpush1.bf16.msra.mxu0 0
    %459 = vmatprep.subr.bf16.mxu0 0
    %460 = vmatpush1.bf16.msra.mxu0 0
    %461 = vmatprep.mubr.bf16.mxu0 0
    %462 = vmatmul.mubr.bf16.gmra.mrb[0].mxu0 %v342
    %v463 = vpop.f32.mrb[0].mxu0
    %v464 = vadd.f32 %v379, %v463
    %v465 = vpop.f32.mrb[0].mxu0
    %v466 = vpop.f32.mrb[0].mxu0
    %v467 = vadd.f32 %v379, %v466
    %v468 = vpop.f32.mrb[0].mxu0
    %469 = vmatprep.mubr.bf16.mxu0 0
    %470 = vmatmul.mubr.bf16.gmra.mrb[0].mxu0 %v343
    %v471 = vpop.f32.mrb[0].mxu0
    %v472 = vadd.f32 %v379, %v471
    %v473 = vpop.f32.mrb[0].mxu0
    %v474 = vpop.f32.mrb[0].mxu0
    %v475 = vadd.f32 %v379, %v474
    %v476 = vpop.f32.mrb[0].mxu0
    %477 = vmatprep.mubr.bf16.mxu0 0
    %478 = vmatmul.mubr.bf16.gmra.mrb[0].mxu0 %v344
    %v479 = vpop.f32.mrb[0].mxu0
    %v480 = vadd.f32 %v379, %v479
    %v481 = vpop.f32.mrb[0].mxu0
    %v482 = vpop.f32.mrb[0].mxu0
    %v483 = vadd.f32 %v379, %v482
    %v484 = vpop.f32.mrb[0].mxu0
    %485 = vmatprep.mubr.bf16.mxu0 0
    %486 = vmatmul.mubr.bf16.gmra.mrb[0].mxu0 %v345
    %v487 = vpop.f32.mrb[0].mxu0
    %v488 = vadd.f32 %v379, %v487
    %v489 = vpop.f32.mrb[0].mxu0
    %v490 = vpop.f32.mrb[0].mxu0
    %v491 = vadd.f32 %v379, %v490
    %v492 = vpop.f32.mrb[0].mxu0
    %493 = vmatprep.mubr.bf16.mxu0 0
    %494 = vmatmul.mubr.bf16.gmra.mrb[0].mxu0 %v346
    %v495 = vpop.f32.mrb[0].mxu0
    %v496 = vadd.f32 %v379, %v495
    %v497 = vpop.f32.mrb[0].mxu0
    %v498 = vpop.f32.mrb[0].mxu0
    %v499 = vadd.f32 %v379, %v498
    %v500 = vpop.f32.mrb[0].mxu0
    %501 = vmatprep.mubr.bf16.mxu0 0
    %502 = vmatmul.mubr.bf16.gmra.mrb[0].mxu0 %v347
    %v503 = vpop.f32.mrb[0].mxu0
    %v504 = vadd.f32 %v379, %v503
    %v505 = vpop.f32.mrb[0].mxu0
    %v506 = vpop.f32.mrb[0].mxu0
    %v507 = vadd.f32 %v379, %v506
    %v508 = vpop.f32.mrb[0].mxu0
    %509 = vmatprep.mubr.bf16.mxu0 0
    %510 = vmatmul.mubr.bf16.gmra.mrb[0].mxu0 %v348
    %v511 = vpop.f32.mrb[0].mxu0
    %v512 = vadd.f32 %v379, %v511
    %v513 = vpop.f32.mrb[0].mxu0
    %v514 = vpop.f32.mrb[0].mxu0
    %v515 = vadd.f32 %v379, %v514
    %v516 = vpop.f32.mrb[0].mxu0
    %517 = vmatprep.mubr.bf16.mxu0 0
    %518 = vmatmul.mubr.bf16.gmra.mrb[0].mxu0 %v349
    %v519 = vpop.f32.mrb[0].mxu0
    %v520 = vadd.f32 %v379, %v519
    %v521 = vpop.f32.mrb[0].mxu0
    %v522 = vpop.f32.mrb[0].mxu0
    %v523 = vadd.f32 %v379, %v522
    %v524 = vpop.f32.mrb[0].mxu0
    %525 = vmatprep.mubr.bf16.mxu0 0
    %526 = vmatmul.mubr.bf16.gmra.mrb[0].mxu0 %v350
    %v527 = vpop.f32.mrb[0].mxu0
    %v528 = vadd.f32 %v379, %v527
    %v529 = vpop.f32.mrb[0].mxu0
    %v530 = vpop.f32.mrb[0].mxu0
    %v531 = vadd.f32 %v379, %v530
    %v532 = vpop.f32.mrb[0].mxu0
    %533 = vmatprep.mubr.bf16.mxu0 0
    %534 = vmatmul.mubr.bf16.gmra.mrb[0].mxu0 %v351
    %v535 = vpop.f32.mrb[0].mxu0
    %v536 = vadd.f32 %v379, %v535
    %v537 = vpop.f32.mrb[0].mxu0
    %v538 = vpop.f32.mrb[0].mxu0
    %v539 = vadd.f32 %v379, %v538
    %v540 = vpop.f32.mrb[0].mxu0
    %541 = vmatprep.mubr.bf16.mxu0 0
    %542 = vmatmul.mubr.bf16.gmra.mrb[0].mxu0 %v352
    %v543 = vpop.f32.mrb[0].mxu0
    %v544 = vadd.f32 %v379, %v543
    %v545 = vpop.f32.mrb[0].mxu0
    %v546 = vpop.f32.mrb[0].mxu0
    %v547 = vadd.f32 %v379, %v546
    %v548 = vpop.f32.mrb[0].mxu0
    %549 = vmatprep.mubr.bf16.mxu0 0
    %550 = vmatmul.mubr.bf16.gmra.mrb[0].mxu0 %v353
    %v551 = vpop.f32.mrb[0].mxu0
    %v552 = vadd.f32 %v379, %v551
    %v553 = vpop.f32.mrb[0].mxu0
    %v554 = vpop.f32.mrb[0].mxu0
    %v555 = vadd.f32 %v379, %v554
    %v556 = vpop.f32.mrb[0].mxu0
    %557 = vmatprep.mubr.bf16.mxu0 0
    %558 = vmatmul.mubr.bf16.gmra.mrb[0].mxu0 %v354
    %v559 = vpop.f32.mrb[0].mxu0
    %v560 = vadd.f32 %v379, %v559
    %v561 = vpop.f32.mrb[0].mxu0
    %v562 = vpop.f32.mrb[0].mxu0
    %v563 = vadd.f32 %v379, %v562
    %v564 = vpop.f32.mrb[0].mxu0
    %565 = vmatprep.mubr.bf16.mxu0 0
    %566 = vmatmul.mubr.bf16.gmra.mrb[0].mxu0 %v355
    %v567 = vpop.f32.mrb[0].mxu0
    %v568 = vadd.f32 %v379, %v567
    %v569 = vpop.f32.mrb[0].mxu0
    %v570 = vpop.f32.mrb[0].mxu0
    %v571 = vadd.f32 %v379, %v570
    %v572 = vpop.f32.mrb[0].mxu0
    %573 = vmatprep.mubr.bf16.mxu0 0
    %574 = vmatmul.mubr.bf16.gmra.mrb[0].mxu0 %v356
    %v575 = vpop.f32.mrb[0].mxu0
    %v576 = vadd.f32 %v379, %v575
    %v577 = vpop.f32.mrb[0].mxu0
    %v578 = vpop.f32.mrb[0].mxu0
    %v579 = vadd.f32 %v379, %v578
    %v580 = vpop.f32.mrb[0].mxu0
    %581 = vmatprep.mubr.bf16.mxu0 0
    %582 = vmatmul.mubr.bf16.gmra.mrb[0].mxu0 %v357
    %v583 = vpop.f32.mrb[0].mxu0
    %v584 = vadd.f32 %v379, %v583
    %v585 = vpop.f32.mrb[0].mxu0
    %v586 = vpop.f32.mrb[0].mxu0
    %v587 = vadd.f32 %v379, %v586
    %v588 = vpop.f32.mrb[0].mxu0
    %589 = vdwg.mxu0
    %v590 = vmax.f32 %v464, 0.0
    %v591 = vmax.f32 %v467, 0.0
    %v592 = vmax.f32 %v472, 0.0
    %v593 = vmax.f32 %v475, 0.0
    %v594 = vmax.f32 %v480, 0.0
    %v595 = vmax.f32 %v483, 0.0
    %v596 = vmax.f32 %v488, 0.0
    %v597 = vmax.f32 %v491, 0.0
    %v598 = vmax.f32 %v496, 0.0
    %v599 = vmax.f32 %v499, 0.0
    %v600 = vmax.f32 %v504, 0.0
    %v601 = vmax.f32 %v507, 0.0
    %v602 = vmax.f32 %v512, 0.0
    %v603 = vmax.f32 %v515, 0.0
    %v604 = vmax.f32 %v520, 0.0
    %v605 = vmax.f32 %v523, 0.0
    %v606 = vmax.f32 %v528, 0.0
    %v607 = vmax.f32 %v531, 0.0
    %v608 = vmax.f32 %v536, 0.0
    %v609 = vmax.f32 %v539, 0.0
    %v610 = vmax.f32 %v544, 0.0
    %v611 = vmax.f32 %v547, 0.0
    %v612 = vmax.f32 %v552, 0.0
    %v613 = vmax.f32 %v555, 0.0
    %v614 = vmax.f32 %v560, 0.0
    %v615 = vmax.f32 %v563, 0.0
    %v616 = vmax.f32 %v568, 0.0
    %v617 = vmax.f32 %v571, 0.0
    %v618 = vmax.f32 %v576, 0.0
    %v619 = vmax.f32 %v579, 0.0
    %v620 = vmax.f32 %v584, 0.0
    %v621 = vmax.f32 %v587, 0.0
    %v622 = vld [vmem:[%s5] sm:$0x1]
    %v624 = vlaneseq
    %v625 = vshrl.u32 %v624, 7
    %v626 = vsub.s32 0, %v625
    %v627 = vrot.slane %v622, %v626
    %v629 = vmul.f32 %v590, %v627
    %v630 = vmul.f32 %v591, %v627
    %v631 = vmul.f32 %v592, %v627
    %v632 = vmul.f32 %v593, %v627
    %v633 = vmul.f32 %v594, %v627
    %v634 = vmul.f32 %v595, %v627
    %v635 = vmul.f32 %v596, %v627
    %v636 = vmul.f32 %v597, %v627
    %v637 = vmul.f32 %v598, %v627
    %v638 = vmul.f32 %v599, %v627
    %v639 = vmul.f32 %v600, %v627
    %v640 = vmul.f32 %v601, %v627
    %v641 = vmul.f32 %v602, %v627
    %v642 = vmul.f32 %v603, %v627
    %v643 = vmul.f32 %v604, %v627
    %v644 = vmul.f32 %v605, %v627
    %v645 = vmul.f32 %v606, %v627
    %v646 = vmul.f32 %v607, %v627
    %v647 = vmul.f32 %v608, %v627
    %v648 = vmul.f32 %v609, %v627
    %v649 = vmul.f32 %v610, %v627
    %v650 = vmul.f32 %v611, %v627
    %v651 = vmul.f32 %v612, %v627
    %v652 = vmul.f32 %v613, %v627
    %v653 = vmul.f32 %v614, %v627
    %v654 = vmul.f32 %v615, %v627
    %v655 = vmul.f32 %v616, %v627
    %v656 = vmul.f32 %v617, %v627
    %v657 = vmul.f32 %v618, %v627
    %v658 = vmul.f32 %v619, %v627
    %v659 = vmul.f32 %v620, %v627
    %v660 = vmul.f32 %v621, %v627
    %661 = vadd.xlane.f32.xlu0 %v629
    %v662 = vpop.xlane.xlu0 %661
    %663 = vadd.xlane.f32.xlu0 %v630
    %v664 = vpop.xlane.xlu0 %663
    %665 = vadd.xlane.f32.xlu0 %v631
    %v666 = vpop.xlane.xlu0 %665
    %667 = vadd.xlane.f32.xlu0 %v632
    %v668 = vpop.xlane.xlu0 %667
    %669 = vadd.xlane.f32.xlu0 %v633
    %v670 = vpop.xlane.xlu0 %669
    %671 = vadd.xlane.f32.xlu0 %v634
    %v672 = vpop.xlane.xlu0 %671
    %673 = vadd.xlane.f32.xlu0 %v635
    %v674 = vpop.xlane.xlu0 %673
    %675 = vadd.xlane.f32.xlu0 %v636
    %v676 = vpop.xlane.xlu0 %675
    %677 = vadd.xlane.f32.xlu0 %v637
    %v678 = vpop.xlane.xlu0 %677
    %679 = vadd.xlane.f32.xlu0 %v638
    %v680 = vpop.xlane.xlu0 %679
    %681 = vadd.xlane.f32.xlu0 %v639
    %v682 = vpop.xlane.xlu0 %681
    %683 = vadd.xlane.f32.xlu0 %v640
    %v684 = vpop.xlane.xlu0 %683
    %685 = vadd.xlane.f32.xlu0 %v641
    %v686 = vpop.xlane.xlu0 %685
    %687 = vadd.xlane.f32.xlu0 %v642
    %v688 = vpop.xlane.xlu0 %687
    %689 = vadd.xlane.f32.xlu0 %v643
    %v690 = vpop.xlane.xlu0 %689
    %691 = vadd.xlane.f32.xlu0 %v644
    %v692 = vpop.xlane.xlu0 %691
    %693 = vadd.xlane.f32.xlu0 %v645
    %v694 = vpop.xlane.xlu0 %693
    %695 = vadd.xlane.f32.xlu0 %v646
    %v696 = vpop.xlane.xlu0 %695
    %697 = vadd.xlane.f32.xlu0 %v647
    %v698 = vpop.xlane.xlu0 %697
    %699 = vadd.xlane.f32.xlu0 %v648
    %v700 = vpop.xlane.xlu0 %699
    %701 = vadd.xlane.f32.xlu0 %v649
    %v702 = vpop.xlane.xlu0 %701
    %703 = vadd.xlane.f32.xlu0 %v650
    %v704 = vpop.xlane.xlu0 %703
    %705 = vadd.xlane.f32.xlu0 %v651
    %v706 = vpop.xlane.xlu0 %705
    %707 = vadd.xlane.f32.xlu0 %v652
    %v708 = vpop.xlane.xlu0 %707
    %709 = vadd.xlane.f32.xlu0 %v653
    %v710 = vpop.xlane.xlu0 %709
    %711 = vadd.xlane.f32.xlu0 %v654
    %v712 = vpop.xlane.xlu0 %711
    %713 = vadd.xlane.f32.xlu0 %v655
    %v714 = vpop.xlane.xlu0 %713
    %715 = vadd.xlane.f32.xlu0 %v656
    %v716 = vpop.xlane.xlu0 %715
    %717 = vadd.xlane.f32.xlu0 %v657
    %v718 = vpop.xlane.xlu0 %717
    %719 = vadd.xlane.f32.xlu0 %v658
    %v720 = vpop.xlane.xlu0 %719
    %721 = vadd.xlane.f32.xlu0 %v659
    %v722 = vpop.xlane.xlu0 %721
    %723 = vadd.xlane.f32.xlu0 %v660
    %v724 = vpop.xlane.xlu0 %723
    %v725 = vld [vmem:[#allocation2] sm:$0x1]
    %v727 = vlaneseq
    %v728 = vshrl.u32 %v727, 7
    %v729 = vsub.s32 0, %v728
    %v730 = vrot.slane %v725, %v729
    %v732 = vadd.f32 %v662, %v730
    %v733 = vadd.f32 %v664, %v730
    %v734 = vadd.f32 %v666, %v730
    %v735 = vadd.f32 %v668, %v730
    %v736 = vadd.f32 %v670, %v730
    %v737 = vadd.f32 %v672, %v730
    %v738 = vadd.f32 %v674, %v730
    %v739 = vadd.f32 %v676, %v730
    %v740 = vadd.f32 %v678, %v730
    %v741 = vadd.f32 %v680, %v730
    %v742 = vadd.f32 %v682, %v730
    %v743 = vadd.f32 %v684, %v730
    %v744 = vadd.f32 %v686, %v730
    %v745 = vadd.f32 %v688, %v730
    %v746 = vadd.f32 %v690, %v730
    %v747 = vadd.f32 %v692, %v730
    %v748 = vadd.f32 %v694, %v730
    %v749 = vadd.f32 %v696, %v730
    %v750 = vadd.f32 %v698, %v730
    %v751 = vadd.f32 %v700, %v730
    %v752 = vadd.f32 %v702, %v730
    %v753 = vadd.f32 %v704, %v730
    %v754 = vadd.f32 %v706, %v730
    %v755 = vadd.f32 %v708, %v730
    %v756 = vadd.f32 %v710, %v730
    %v757 = vadd.f32 %v712, %v730
    %v758 = vadd.f32 %v714, %v730
    %v759 = vadd.f32 %v716, %v730
    %v760 = vadd.f32 %v718, %v730
    %v761 = vadd.f32 %v720, %v730
    %v762 = vadd.f32 %v722, %v730
    %v763 = vadd.f32 %v724, %v730
    %vm764 = vcmask 7168
    %765 = vst.msk [vmem:[#allocation3] sm:$0xff] %vm764, %v732
    %766 = vst.msk [vmem:[#allocation3 + $0x8] sm:$0xff] %vm764, %v733
    %767 = vst.msk [vmem:[#allocation3 + $0x10] sm:$0xff] %vm764, %v734
    %768 = vst.msk [vmem:[#allocation3 + $0x18] sm:$0xff] %vm764, %v735
    %769 = vst.msk [vmem:[#allocation3 + $0x20] sm:$0xff] %vm764, %v736
    %770 = vst.msk [vmem:[#allocation3 + $0x28] sm:$0xff] %vm764, %v737
    %771 = vst.msk [vmem:[#allocation3 + $0x30] sm:$0xff] %vm764, %v738
    %772 = vst.msk [vmem:[#allocation3 + $0x38] sm:$0xff] %vm764, %v739
    %773 = vst.msk [vmem:[#allocation3 + $0x40] sm:$0xff] %vm764, %v740
    %774 = vst.msk [vmem:[#allocation3 + $0x48] sm:$0xff] %vm764, %v741
    %775 = vst.msk [vmem:[#allocation3 + $0x50] sm:$0xff] %vm764, %v742
    %776 = vst.msk [vmem:[#allocation3 + $0x58] sm:$0xff] %vm764, %v743
    %777 = vst.msk [vmem:[#allocation3 + $0x60] sm:$0xff] %vm764, %v744
    %778 = vst.msk [vmem:[#allocation3 + $0x68] sm:$0xff] %vm764, %v745
    %779 = vst.msk [vmem:[#allocation3 + $0x70] sm:$0xff] %vm764, %v746
    %780 = vst.msk [vmem:[#allocation3 + $0x78] sm:$0xff] %vm764, %v747
    %781 = vst.msk [vmem:[#allocation3 + $0x80] sm:$0xff] %vm764, %v748
    %782 = vst.msk [vmem:[#allocation3 + $0x88] sm:$0xff] %vm764, %v749
    %783 = vst.msk [vmem:[#allocation3 + $0x90] sm:$0xff] %vm764, %v750
    %784 = vst.msk [vmem:[#allocation3 + $0x98] sm:$0xff] %vm764, %v751
    %785 = vst.msk [vmem:[#allocation3 + $0xa0] sm:$0xff] %vm764, %v752
    %786 = vst.msk [vmem:[#allocation3 + $0xa8] sm:$0xff] %vm764, %v753
    %787 = vst.msk [vmem:[#allocation3 + $0xb0] sm:$0xff] %vm764, %v754
    %788 = vst.msk [vmem:[#allocation3 + $0xb8] sm:$0xff] %vm764, %v755
    %789 = vst.msk [vmem:[#allocation3 + $0xc0] sm:$0xff] %vm764, %v756
    %790 = vst.msk [vmem:[#allocation3 + $0xc8] sm:$0xff] %vm764, %v757
    %791 = vst.msk [vmem:[#allocation3 + $0xd0] sm:$0xff] %vm764, %v758
    %792 = vst.msk [vmem:[#allocation3 + $0xd8] sm:$0xff] %vm764, %v759
    %793 = vst.msk [vmem:[#allocation3 + $0xe0] sm:$0xff] %vm764, %v760
    %794 = vst.msk [vmem:[#allocation3 + $0xe8] sm:$0xff] %vm764, %v761
    %795 = vst.msk [vmem:[#allocation3 + $0xf0] sm:$0xff] %vm764, %v762
    %796 = vst.msk [vmem:[#allocation3 + $0xf8] sm:$0xff] %vm764, %v763
    // Predicated region
    $region30: #{tpu_custom_call.1} parent=1 // pred_check
      _
    $region31: #{tpu_custom_call.1} parent=1 // pred_check_branch
      %798 = sbr.rel (0) target = $region33
    $region32: #{tpu_custom_call.1} parent=1 // pred_region
      // Predicated region
      $region34: #{tpu_custom_call.1} parent=32 // pred_check
        _
      $region35: #{tpu_custom_call.1} parent=32 // pred_check_branch
        %800 = sbr.rel (0) target = $region37
      $region36: #{tpu_custom_call.1} parent=32 // pred_region
        // Predicated region
        $region38: #{tpu_custom_call.1} parent=36 // pred_check
          _
        $region39: #{tpu_custom_call.1} parent=36 // pred_check_branch
          %802 = sbr.rel (0) target = $region41
        $region40: #{tpu_custom_call.1} parent=36 // pred_region
          // Predicated region
          $region53: #{tpu_custom_call.1} parent=40 // pred_check
            _
          $region54: #{tpu_custom_call.1} parent=40 // pred_check_branch
            %865 = sbr.rel (0) target = $region56
          $region55: #{tpu_custom_call.1} parent=40 // pred_region
            loop: start=0, step=1, limit=1
            $region57: #{tpu_custom_call.1} parent=55 // loop_pre_header
              _
            $region58: #{tpu_custom_call.1} parent=55 // loop_header
              %s867 = sphi 0, %s871
              %p868 = scmp.ge.s32.totalorder %s867, 1
              %s872 = sphi [#allocation3], [#allocation3]
              %s873 = sphi %s7, %s7
            $region59: #{tpu_custom_call.1} parent=55 // loop_header_branch
              %870 = sbr.rel (%p868) target = $region63
            $region60: #{tpu_custom_call.1} parent=55 // loop_body
              %v874 = vld [vmem:[%s872] sm:$0xff]
              %875 = vst [vmem:[%s873] sm:$0xff] %v874
              %v876 = vld [vmem:[%s872 + $0x8] sm:$0xff]
              %877 = vst [vmem:[%s873 + $0x8] sm:$0xff] %v876
              %v878 = vld [vmem:[%s872 + $0x10] sm:$0xff]
              %879 = vst [vmem:[%s873 + $0x10] sm:$0xff] %v878
              %v880 = vld [vmem:[%s872 + $0x18] sm:$0xff]
              %881 = vst [vmem:[%s873 + $0x18] sm:$0xff] %v880
              %v882 = vld [vmem:[%s872 + $0x20] sm:$0xff]
              %883 = vst [vmem:[%s873 + $0x20] sm:$0xff] %v882
              %v884 = vld [vmem:[%s872 + $0x28] sm:$0xff]
              %885 = vst [vmem:[%s873 + $0x28] sm:$0xff] %v884
              %v886 = vld [vmem:[%s872 + $0x30] sm:$0xff]
              %887 = vst [vmem:[%s873 + $0x30] sm:$0xff] %v886
              %v888 = vld [vmem:[%s872 + $0x38] sm:$0xff]
              %889 = vst [vmem:[%s873 + $0x38] sm:$0xff] %v888
              %v890 = vld [vmem:[%s872 + $0x40] sm:$0xff]
              %891 = vst [vmem:[%s873 + $0x40] sm:$0xff] %v890
              %v892 = vld [vmem:[%s872 + $0x48] sm:$0xff]
              %893 = vst [vmem:[%s873 + $0x48] sm:$0xff] %v892
              %v894 = vld [vmem:[%s872 + $0x50] sm:$0xff]
              %895 = vst [vmem:[%s873 + $0x50] sm:$0xff] %v894
              %v896 = vld [vmem:[%s872 + $0x58] sm:$0xff]
              %897 = vst [vmem:[%s873 + $0x58] sm:$0xff] %v896
              %v898 = vld [vmem:[%s872 + $0x60] sm:$0xff]
              %899 = vst [vmem:[%s873 + $0x60] sm:$0xff] %v898
              %v900 = vld [vmem:[%s872 + $0x68] sm:$0xff]
              %901 = vst [vmem:[%s873 + $0x68] sm:$0xff] %v900
              %v902 = vld [vmem:[%s872 + $0x70] sm:$0xff]
              %903 = vst [vmem:[%s873 + $0x70] sm:$0xff] %v902
              %v904 = vld [vmem:[%s872 + $0x78] sm:$0xff]
              %905 = vst [vmem:[%s873 + $0x78] sm:$0xff] %v904
              %v906 = vld [vmem:[%s872 + $0x80] sm:$0xff]
              %907 = vst [vmem:[%s873 + $0x80] sm:$0xff] %v906
              %v908 = vld [vmem:[%s872 + $0x88] sm:$0xff]
              %909 = vst [vmem:[%s873 + $0x88] sm:$0xff] %v908
              %v910 = vld [vmem:[%s872 + $0x90] sm:$0xff]
              %911 = vst [vmem:[%s873 + $0x90] sm:$0xff] %v910
              %v912 = vld [vmem:[%s872 + $0x98] sm:$0xff]
              %913 = vst [vmem:[%s873 + $0x98] sm:$0xff] %v912
              %v914 = vld [vmem:[%s872 + $0xa0] sm:$0xff]
              %915 = vst [vmem:[%s873 + $0xa0] sm:$0xff] %v914
              %v916 = vld [vmem:[%s872 + $0xa8] sm:$0xff]
              %917 = vst [vmem:[%s873 + $0xa8] sm:$0xff] %v916
              %v918 = vld [vmem:[%s872 + $0xb0] sm:$0xff]
              %919 = vst [vmem:[%s873 + $0xb0] sm:$0xff] %v918
              %v920 = vld [vmem:[%s872 + $0xb8] sm:$0xff]
              %921 = vst [vmem:[%s873 + $0xb8] sm:$0xff] %v920
              %v922 = vld [vmem:[%s872 + $0xc0] sm:$0xff]
              %923 = vst [vmem:[%s873 + $0xc0] sm:$0xff] %v922
            $region61: #{tpu_custom_call.1} parent=55 // loop_footer
              %s871 = sadd.s32 1, %s867
            $region62: #{tpu_custom_call.1} parent=55 // loop_footer_branch
              %866 = sbr.rel target = $region58
            $region63: #{tpu_custom_call.1} parent=55 // loop_exit
              _
          $region56: #{tpu_custom_call.1} parent=40 // pred_fallthru
            _
          // Predicated region
          $region64: #{tpu_custom_call.1} parent=40 // pred_check
            _
          $region65: #{tpu_custom_call.1} parent=40 // pred_check_branch
            %925 = sbr.rel target = $region67
          $region66: #{tpu_custom_call.1} parent=40 // pred_region
            _
          $region67: #{tpu_custom_call.1} parent=40 // pred_fallthru
            _
        $region41: #{tpu_custom_call.1} parent=36 // pred_fallthru
          _
        // Predicated region
        $region42: #{tpu_custom_call.1} parent=36 // pred_check
          _
        $region43: #{tpu_custom_call.1} parent=36 // pred_check_branch
          %804 = sbr.rel target = $region45
        $region44: #{tpu_custom_call.1} parent=36 // pred_region
          loop: start=0, step=1, limit=1
          $region46: #{tpu_custom_call.1} parent=44 // loop_pre_header
            _
          $region47: #{tpu_custom_call.1} parent=44 // loop_header
            %s807 = sphi 0, %s811
            %p808 = scmp.ge.s32.totalorder %s807, 1
            %s812 = sphi [#allocation3], [#allocation3]
            %s813 = sphi %s7, %s7
          $region48: #{tpu_custom_call.1} parent=44 // loop_header_branch
            %810 = sbr.rel (%p808) target = $region52
          $region49: #{tpu_custom_call.1} parent=44 // loop_body
            %v814 = vld [vmem:[%s812] sm:$0xff]
            %815 = vst [vmem:[%s813] sm:$0xff] %v814
            %v816 = vld [vmem:[%s812 + $0x8] sm:$0xff]
            %817 = vst [vmem:[%s813 + $0x8] sm:$0xff] %v816
            %v818 = vld [vmem:[%s812 + $0x10] sm:$0xff]
            %819 = vst [vmem:[%s813 + $0x10] sm:$0xff] %v818
            %v820 = vld [vmem:[%s812 + $0x18] sm:$0xff]
            %821 = vst [vmem:[%s813 + $0x18] sm:$0xff] %v820
            %v822 = vld [vmem:[%s812 + $0x20] sm:$0xff]
            %823 = vst [vmem:[%s813 + $0x20] sm:$0xff] %v822
            %v824 = vld [vmem:[%s812 + $0x28] sm:$0xff]
            %825 = vst [vmem:[%s813 + $0x28] sm:$0xff] %v824
            %v826 = vld [vmem:[%s812 + $0x30] sm:$0xff]
            %827 = vst [vmem:[%s813 + $0x30] sm:$0xff] %v826
            %v828 = vld [vmem:[%s812 + $0x38] sm:$0xff]
            %829 = vst [vmem:[%s813 + $0x38] sm:$0xff] %v828
            %v830 = vld [vmem:[%s812 + $0x40] sm:$0xff]
            %831 = vst [vmem:[%s813 + $0x40] sm:$0xff] %v830
            %v832 = vld [vmem:[%s812 + $0x48] sm:$0xff]
            %833 = vst [vmem:[%s813 + $0x48] sm:$0xff] %v832
            %v834 = vld [vmem:[%s812 + $0x50] sm:$0xff]
            %835 = vst [vmem:[%s813 + $0x50] sm:$0xff] %v834
            %v836 = vld [vmem:[%s812 + $0x58] sm:$0xff]
            %837 = vst [vmem:[%s813 + $0x58] sm:$0xff] %v836
            %v838 = vld [vmem:[%s812 + $0x60] sm:$0xff]
            %839 = vst [vmem:[%s813 + $0x60] sm:$0xff] %v838
            %v840 = vld [vmem:[%s812 + $0x68] sm:$0xff]
            %841 = vst [vmem:[%s813 + $0x68] sm:$0xff] %v840
            %v842 = vld [vmem:[%s812 + $0x70] sm:$0xff]
            %843 = vst [vmem:[%s813 + $0x70] sm:$0xff] %v842
            %v844 = vld [vmem:[%s812 + $0x78] sm:$0xff]
            %845 = vst [vmem:[%s813 + $0x78] sm:$0xff] %v844
            %v846 = vld [vmem:[%s812 + $0x80] sm:$0xff]
            %847 = vst [vmem:[%s813 + $0x80] sm:$0xff] %v846
            %v848 = vld [vmem:[%s812 + $0x88] sm:$0xff]
            %849 = vst [vmem:[%s813 + $0x88] sm:$0xff] %v848
            %v850 = vld [vmem:[%s812 + $0x90] sm:$0xff]
            %851 = vst [vmem:[%s813 + $0x90] sm:$0xff] %v850
            %v852 = vld [vmem:[%s812 + $0x98] sm:$0xff]
            %853 = vst [vmem:[%s813 + $0x98] sm:$0xff] %v852
            %v854 = vld [vmem:[%s812 + $0xa0] sm:$0xff]
            %855 = vst [vmem:[%s813 + $0xa0] sm:$0xff] %v854
            %v856 = vld [vmem:[%s812 + $0xa8] sm:$0xff]
            %857 = vst [vmem:[%s813 + $0xa8] sm:$0xff] %v856
            %v858 = vld [vmem:[%s812 + $0xb0] sm:$0xff]
            %859 = vst [vmem:[%s813 + $0xb0] sm:$0xff] %v858
            %v860 = vld [vmem:[%s812 + $0xb8] sm:$0xff]
            %861 = vst [vmem:[%s813 + $0xb8] sm:$0xff] %v860
            %v862 = vld [vmem:[%s812 + $0xc0] sm:$0xff]
            %863 = vst [vmem:[%s813 + $0xc0] sm:$0xff] %v862
          $region50: #{tpu_custom_call.1} parent=44 // loop_footer
            %s811 = sadd.s32 1, %s807
          $region51: #{tpu_custom_call.1} parent=44 // loop_footer_branch
            %806 = sbr.rel target = $region47
          $region52: #{tpu_custom_call.1} parent=44 // loop_exit
            _
        $region45: #{tpu_custom_call.1} parent=36 // pred_fallthru
          _
      $region37: #{tpu_custom_call.1} parent=32 // pred_fallthru
        _
      %926 = vnop
    $region33: #{tpu_custom_call.1} parent=1 // pred_fallthru
      _
    // Predicated region
    $region68: #{tpu_custom_call.1} parent=1 // pred_check
      _
    $region69: #{tpu_custom_call.1} parent=1 // pred_check_branch
      %928 = sbr.rel (0) target = $region71
    $region70: #{tpu_custom_call.1} parent=1 // pred_region
      _
    $region71: #{tpu_custom_call.1} parent=1 // pred_fallthru
      _

</llo_original>
